<compile_context>
chip_gen: v6e
topology: v6e:2x2x1
jax: 0.10.0
libtpu: 0.0.40
codegen_flags: <defaults>
</compile_context>

<pallas_src>
import jax
import jax.numpy as jnp
from jax.experimental import pallas as pl
from jax.experimental.pallas import tpu as pltpu


def _round_up(n, m):
    return ((n + m - 1) // m) * m


def _cdiv(a, b):
    return -(-a // b)


def dqn_kernel(x_ref, w1_ref, b1_ref, w2_ref, b2_ref, w3_ref, b3_ref, o_ref):
    # Layer 1: Linear(in_dim -> 128) + ReLU. bf16 operands, f32 MXU accumulate.
    h1 = jnp.dot(x_ref[...], w1_ref[...], preferred_element_type=jnp.float32)
    h1 = jnp.maximum(h1 + b1_ref[...], 0.0)
    # Layer 2: Linear(128 -> 64) + ReLU.
    h2 = jnp.dot(h1.astype(w2_ref.dtype), w2_ref[...],
                 preferred_element_type=jnp.float32)
    h2 = jnp.maximum(h2 + b2_ref[...], 0.0)
    # Layer 3: Linear(64 -> out_dim), no activation.
    out = jnp.dot(h2.astype(w3_ref.dtype), w3_ref[...],
                  preferred_element_type=jnp.float32) + b3_ref[...]
    o_ref[...] = out.astype(o_ref.dtype)


def dqn_forward(x, params, *, tile_b=4096, interpret=False):
    """Fused DQN forward. x: (B, input_dim) float32. Returns (B, output_dim) f32."""
    w1, b1, w2, b2, w3, b3 = params
    B, in_dim = x.shape
    h1_dim = w1.shape[1]   # 128
    h2_dim = w2.shape[1]   # 64
    out_dim = w3.shape[1]  # number of actions

    # --- Balanced batch tiling (tb multiple of 16 for bf16 sublane packing). ---
    num_tiles = max(_cdiv(B, tile_b), 1)
    # Ensure >= 2 grid steps for mid/large batches so the "parallel" axis can
    # shard across both v7x TensorCores (no point splitting tiny batches).
    if num_tiles == 1 and B > 256:
        num_tiles = 2
    tb = _round_up(_cdiv(B, num_tiles), 16)
    b_pad = tb * num_tiles
    grid = (num_tiles,)

    bf16, f32 = jnp.bfloat16, jnp.float32

    # bf16 activations/weights (halved HBM traffic), f32 biases (exact add).
    xp = x.astype(bf16)
    if b_pad != B:
        xp = jnp.pad(xp, ((0, b_pad - B), (0, 0)))
    w1b, w2b, w3b = (w.astype(bf16) for w in (w1, w2, w3))
    b1f, b2f, b3f = (b.astype(f32) for b in (b1, b2, b3))

    # Whole-array blocks with constant index_map -> fetched once, VMEM-resident.
    whole = lambda a: pl.BlockSpec(a.shape, lambda i: (0,) * a.ndim)

    flops = 2 * b_pad * (in_dim * h1_dim + h1_dim * h2_dim + h2_dim * out_dim)
    bytes_accessed = (2 * xp.size + 4 * b_pad * out_dim
                      + 2 * (w1b.size + w2b.size + w3b.size)
                      + 4 * (b1f.size + b2f.size + b3f.size))

    out_padded = pl.pallas_call(
        dqn_kernel,
        out_shape=jax.ShapeDtypeStruct((b_pad, out_dim), f32),
        grid=grid,
        in_specs=[
            pl.BlockSpec((tb, in_dim), lambda i: (i, 0)),  # x: tiled over batch
            whole(w1b), whole(b1f),
            whole(w2b), whole(b2f),
            whole(w3b), whole(b3f),
        ],
        out_specs=pl.BlockSpec((tb, out_dim), lambda i: (i, 0)),
        compiler_params=pltpu.CompilerParams(
            dimension_semantics=("parallel",),
            vmem_limit_bytes=32 * 1024 * 1024),
        cost_estimate=pl.CostEstimate(
            flops=flops, transcendentals=0, bytes_accessed=bytes_accessed),
        interpret=interpret,
    )(xp, w1b, b1f, w2b, b2f, w3b, b3f)

    return out_padded[:B] if b_pad != B else out_padded


def init_params(key, input_dim, output_dim):
    """Matches nn.Linear default init: uniform(-1/sqrt(fan_in), 1/sqrt(fan_in)).
    Weights stored transposed vs PyTorch, i.e. (in_features, out_features)."""
    dims = [(input_dim, 128), (128, 64), (64, output_dim)]
    params = []
    for fan_in, fan_out in dims:
        kw, kb, key = jax.random.split(key, 3)
        bound = 1.0 / jnp.sqrt(fan_in)
        w = jax.random.uniform(kw, (fan_in, fan_out), jnp.float32, -bound, bound)
        b = jax.random.uniform(kb, (1, fan_out), jnp.float32, -bound, bound)
        params += [w, b]
    return tuple(params)


if __name__ == "__main__":
    key = jax.random.PRNGKey(0)
    batch, input_dim, output_dim = 2, 16, 4

    kx, kp = jax.random.split(key)
    x = jax.random.normal(kx, (batch, input_dim), jnp.float32)
    params = init_params(kp, input_dim, output_dim)

    out = dqn_forward(x, params)
    jax.block_until_ready(out)

    # Reference check in plain JAX f32 (bf16 activations in the kernel -> use a
    # moderate tolerance; values here are O(1) so 1e-2 is comfortable).
    w1, b1, w2, b2, w3, b3 = params
    h1 = jnp.maximum(x @ w1 + b1, 0.0)
    h2 = jnp.maximum(h1 @ w2 + b2, 0.0)
    ref = h2 @ w3 + b3
    assert out.shape == (batch, output_dim)
    assert jnp.allclose(out, ref, atol=1e-2, rtol=1e-2)
    print("KERNEL_OK")
</pallas_src>

<mosaic_0001>
module attributes {stable_mosaic.version = 11 : i64} {
  func.func @dqn_kernel(%arg0: i32, %arg1: memref<16x16xbf16, #tpu.memory_space<vmem>>, %arg2: memref<16x128xbf16, #tpu.memory_space<vmem>>, %arg3: memref<1x128xf32, #tpu.memory_space<vmem>>, %arg4: memref<128x64xbf16, #tpu.memory_space<vmem>>, %arg5: memref<1x64xf32, #tpu.memory_space<vmem>>, %arg6: memref<64x4xbf16, #tpu.memory_space<vmem>>, %arg7: memref<1x4xf32, #tpu.memory_space<vmem>>, %arg8: memref<16x4xf32, #tpu.memory_space<vmem>>) attributes {dimension_semantics = [#tpu.dimension_semantics<parallel>], iteration_bounds = array<i64: 1>, scalar_prefetch = 0 : i64, scratch_operands = 0 : i64, tpu.core_type = #tpu.core_type<tc>, window_params = [{transform_indices = @transform_0, window_bounds = array<i64: 16, 16>}, {pipeline_mode = #tpu.pipeline_mode<synchronous>, transform_indices = @transform_1, window_bounds = array<i64: 16, 128>}, {pipeline_mode = #tpu.pipeline_mode<synchronous>, transform_indices = @transform_2, window_bounds = array<i64: 1, 128>}, {pipeline_mode = #tpu.pipeline_mode<synchronous>, transform_indices = @transform_3, window_bounds = array<i64: 128, 64>}, {pipeline_mode = #tpu.pipeline_mode<synchronous>, transform_indices = @transform_4, window_bounds = array<i64: 1, 64>}, {pipeline_mode = #tpu.pipeline_mode<synchronous>, transform_indices = @transform_5, window_bounds = array<i64: 64, 4>}, {pipeline_mode = #tpu.pipeline_mode<synchronous>, transform_indices = @transform_6, window_bounds = array<i64: 1, 4>}, {transform_indices = @transform_7, window_bounds = array<i64: 16, 4>}]} {
    %c0 = arith.constant 0 : index
    %c0_0 = arith.constant 0 : index
    %0 = vector.load %arg1[%c0, %c0_0] : memref<16x16xbf16, #tpu.memory_space<vmem>>, vector<16x16xbf16>
    %c0_1 = arith.constant 0 : index
    %c0_2 = arith.constant 0 : index
    %1 = vector.load %arg2[%c0_1, %c0_2] : memref<16x128xbf16, #tpu.memory_space<vmem>>, vector<16x128xbf16>
    %cst = arith.constant dense<0.000000e+00> : vector<16x128xf32>
    %2 = tpu.matmul %0, %1, %cst {dimension_numbers = #tpu.dot_dimension_numbers<[1], [0], [0], [1], [0, 0, 1, 1], [], []>} : vector<16x16xbf16>, vector<16x128xbf16>, vector<16x128xf32> -> vector<16x128xf32>
    %c0_3 = arith.constant 0 : index
    %c0_4 = arith.constant 0 : index
    %3 = vector.load %arg3[%c0_3, %c0_4] : memref<1x128xf32, #tpu.memory_space<vmem>>, vector<1x128xf32>
    %4 = vector.broadcast %3 : vector<1x128xf32> to vector<16x128xf32>
    %5 = arith.addf %2, %4 : vector<16x128xf32>
    %cst_5 = arith.constant 0.000000e+00 : f32
    %6 = vector.broadcast %cst_5 : f32 to vector<16x128xf32>
    %7 = arith.maximumf %5, %6 : vector<16x128xf32>
    %8 = arith.truncf %7 : vector<16x128xf32> to vector<16x128xbf16>
    %c0_6 = arith.constant 0 : index
    %c0_7 = arith.constant 0 : index
    %9 = vector.load %arg4[%c0_6, %c0_7] : memref<128x64xbf16, #tpu.memory_space<vmem>>, vector<128x64xbf16>
    %cst_8 = arith.constant dense<0.000000e+00> : vector<16x64xf32>
    %10 = tpu.matmul %8, %9, %cst_8 {dimension_numbers = #tpu.dot_dimension_numbers<[1], [0], [0], [1], [0, 0, 1, 1], [], []>} : vector<16x128xbf16>, vector<128x64xbf16>, vector<16x64xf32> -> vector<16x64xf32>
    %c0_9 = arith.constant 0 : index
    %c0_10 = arith.constant 0 : index
    %11 = vector.load %arg5[%c0_9, %c0_10] : memref<1x64xf32, #tpu.memory_space<vmem>>, vector<1x64xf32>
    %12 = vector.broadcast %11 : vector<1x64xf32> to vector<16x64xf32>
    %13 = arith.addf %10, %12 : vector<16x64xf32>
    %cst_11 = arith.constant 0.000000e+00 : f32
    %14 = vector.broadcast %cst_11 : f32 to vector<16x64xf32>
    %15 = arith.maximumf %13, %14 : vector<16x64xf32>
    %16 = arith.truncf %15 : vector<16x64xf32> to vector<16x64xbf16>
    %c0_12 = arith.constant 0 : index
    %c0_13 = arith.constant 0 : index
    %17 = vector.load %arg6[%c0_12, %c0_13] : memref<64x4xbf16, #tpu.memory_space<vmem>>, vector<64x4xbf16>
    %cst_14 = arith.constant dense<0.000000e+00> : vector<16x4xf32>
    %18 = tpu.matmul %16, %17, %cst_14 {dimension_numbers = #tpu.dot_dimension_numbers<[1], [0], [0], [1], [0, 0, 1, 1], [], []>} : vector<16x64xbf16>, vector<64x4xbf16>, vector<16x4xf32> -> vector<16x4xf32>
    %c0_15 = arith.constant 0 : index
    %c0_16 = arith.constant 0 : index
    %19 = vector.load %arg7[%c0_15, %c0_16] : memref<1x4xf32, #tpu.memory_space<vmem>>, vector<1x4xf32>
    %20 = vector.broadcast %19 : vector<1x4xf32> to vector<16x4xf32>
    %21 = arith.addf %18, %20 : vector<16x4xf32>
    %c0_17 = arith.constant 0 : index
    %c0_18 = arith.constant 0 : index
    %22 = vector.load %arg8[%c0_17, %c0_18] : memref<16x4xf32, #tpu.memory_space<vmem>>, vector<16x4xf32>
    tpu.vector_store %arg8[%c0_17, %c0_18], %21 {strides = array<i32>} : memref<16x4xf32, #tpu.memory_space<vmem>>, vector<16x4xf32>,
    return
  }
  func.func @transform_0(%arg0: i32) -> (i32, i32) {
    %c0_i32 = arith.constant 0 : i32
    %c0_i32_0 = arith.constant 0 : i32
    return %arg0, %c0_i32 : i32, i32
  }
  func.func @transform_1(%arg0: i32) -> (i32, i32) {
    %c0_i32 = arith.constant 0 : i32
    %c0_i32_0 = arith.constant 0 : i32
    %c0_i32_1 = arith.constant 0 : i32
    return %c0_i32, %c0_i32_0 : i32, i32
  }
  func.func @transform_2(%arg0: i32) -> (i32, i32) {
    %c0_i32 = arith.constant 0 : i32
    %c0_i32_0 = arith.constant 0 : i32
    %c0_i32_1 = arith.constant 0 : i32
    return %c0_i32, %c0_i32_0 : i32, i32
  }
  func.func @transform_3(%arg0: i32) -> (i32, i32) {
    %c0_i32 = arith.constant 0 : i32
    %c0_i32_0 = arith.constant 0 : i32
    %c0_i32_1 = arith.constant 0 : i32
    return %c0_i32, %c0_i32_0 : i32, i32
  }
  func.func @transform_4(%arg0: i32) -> (i32, i32) {
    %c0_i32 = arith.constant 0 : i32
    %c0_i32_0 = arith.constant 0 : i32
    %c0_i32_1 = arith.constant 0 : i32
    return %c0_i32, %c0_i32_0 : i32, i32
  }
  func.func @transform_5(%arg0: i32) -> (i32, i32) {
    %c0_i32 = arith.constant 0 : i32
    %c0_i32_0 = arith.constant 0 : i32
    %c0_i32_1 = arith.constant 0 : i32
    return %c0_i32, %c0_i32_0 : i32, i32
  }
  func.func @transform_6(%arg0: i32) -> (i32, i32) {
    %c0_i32 = arith.constant 0 : i32
    %c0_i32_0 = arith.constant 0 : i32
    %c0_i32_1 = arith.constant 0 : i32
    return %c0_i32, %c0_i32_0 : i32, i32
  }
  func.func @transform_7(%arg0: i32) -> (i32, i32) {
    %c0_i32 = arith.constant 0 : i32
    %c0_i32_0 = arith.constant 0 : i32
    return %arg0, %c0_i32 : i32, i32
  }
}

</mosaic_0001>

<llo_original>
// kernel: tpu_custom_call.1
$region0: #{tpu_custom_call.1}
  #allocation0 [shape = 'u32[]', space=smem, size = 0x4, offset = 0x4, fixed_abs, tag = 'smem constant byte address 0x4 - core index']
  #allocation1 [shape = 'u32[144,128]{1,0:T(1,128)}', space=vmem, size = 0x12000, scoped, tag = 'internal scratch']
  %s0 = inlined_call_operand.vmem [shape: bf16[16,16], index: 0, kind: input, shape index: {}]
  %s1 = inlined_call_operand.vmem [shape: bf16[16,128], index: 1, kind: input, shape index: {}]
  %s2 = inlined_call_operand.vmem [shape: f32[1,128], index: 2, kind: input, shape index: {}]
  %s3 = inlined_call_operand.vmem [shape: bf16[128,64], index: 3, kind: input, shape index: {}]
  %s4 = inlined_call_operand.vmem [shape: f32[1,64], index: 4, kind: input, shape index: {}]
  %s5 = inlined_call_operand.vmem [shape: bf16[64,4], index: 5, kind: input, shape index: {}]
  %s6 = inlined_call_operand.vmem [shape: f32[1,4], index: 6, kind: input, shape index: {}]
  %s7 = inlined_call_operand.vmem [shape: f32[16,4], index: 7, kind: output, shape index: {}]
  %s8 = sld [smem:[#allocation0]]
  $region38: #{tpu_custom_call.1} parent=0
    _
  %s10 = ssub.s32 1, %s8
  %s11 = scalar_select 0, %s10, %s8
  // Predicated region
  $region2: #{tpu_custom_call.1} parent=0 // pred_check
    _
  $region3: #{tpu_custom_call.1} parent=0 // pred_check_branch
    %13 = sbr.rel (0) target = $region5
  $region4: #{tpu_custom_call.1} parent=0 // pred_region
    _
  $region5: #{tpu_custom_call.1} parent=0 // pred_fallthru
    _
  // Predicated region
  $region6: #{tpu_custom_call.1} parent=0 // pred_check
    _
  $region7: #{tpu_custom_call.1} parent=0 // pred_check_branch
    %15 = sbr.rel (0) target = $region9
  $region8: #{tpu_custom_call.1} parent=0 // pred_region
    _
  $region9: #{tpu_custom_call.1} parent=0 // pred_fallthru
    _
  // Predicated region
  $region10: #{tpu_custom_call.1} parent=0 // pred_check
    _
  $region11: #{tpu_custom_call.1} parent=0 // pred_check_branch
    %17 = sbr.rel (0) target = $region13
  $region12: #{tpu_custom_call.1} parent=0 // pred_region
    _
  $region13: #{tpu_custom_call.1} parent=0 // pred_fallthru
    _
  // Predicated region
  $region14: #{tpu_custom_call.1} parent=0 // pred_check
    _
  $region15: #{tpu_custom_call.1} parent=0 // pred_check_branch
    %19 = sbr.rel (0) target = $region17
  $region16: #{tpu_custom_call.1} parent=0 // pred_region
    _
  $region17: #{tpu_custom_call.1} parent=0 // pred_fallthru
    _
  // Predicated region
  $region18: #{tpu_custom_call.1} parent=0 // pred_check
    _
  $region19: #{tpu_custom_call.1} parent=0 // pred_check_branch
    %21 = sbr.rel (0) target = $region21
  $region20: #{tpu_custom_call.1} parent=0 // pred_region
    _
  $region21: #{tpu_custom_call.1} parent=0 // pred_fallthru
    _
  // Predicated region
  $region22: #{tpu_custom_call.1} parent=0 // pred_check
    _
  $region23: #{tpu_custom_call.1} parent=0 // pred_check_branch
    %23 = sbr.rel (0) target = $region25
  $region24: #{tpu_custom_call.1} parent=0 // pred_region
    _
  $region25: #{tpu_custom_call.1} parent=0 // pred_fallthru
    _
  // Predicated region
  $region26: #{tpu_custom_call.1} parent=0 // pred_check
    _
  $region27: #{tpu_custom_call.1} parent=0 // pred_check_branch
    %25 = sbr.rel (0) target = $region29
  $region28: #{tpu_custom_call.1} parent=0 // pred_region
    _
  $region29: #{tpu_custom_call.1} parent=0 // pred_fallthru
    _
  %v27 = vld [vmem:[%s0] sm:$0xf]
  %v28 = vld [vmem:[%s0 + $0x4] sm:$0xf]
  %v29 = vld [vmem:[%s1] sm:$0xf]
  %v30 = vld [vmem:[%s1 + $0x4] sm:$0xf]
  %v31 = vld [vmem:[%s2] sm:$0x1]
  %v33 = vlaneseq
  %v34 = vshrl.u32 %v33, 7
  %v35 = vsub.s32 0, %v34
  %v36 = vrot.slane %v31, %v35
  %v40 = vunpack.c.l.b16 %v27
  %v41 = vunpack.c.l.b16 %v28
  %v42 = vpack.c.b16 %v41, %v40
  %v45 = vunpack.c.l.b16 %v29
  %v46 = vunpack.c.l.b16 %v30
  %v47 = vpack.c.b16 %v46, %v45
  %vm49 = vcmask 130048
  %v51 = vsel %vm49, %v42, 0
  %53 = vmatprep.subr.bf16.mxu0 0
  %54 = vmatpush1.bf16.msra.mxu0 0
  %55 = vmatprep.subr.bf16.mxu0 0
  %56 = vmatpush1.bf16.msra.mxu0 0
  %57 = vmatprep.subr.bf16.mxu0 0
  %58 = vmatpush1.bf16.msra.mxu0 0
  %59 = vmatprep.subr.bf16.mxu0 0
  %60 = vmatpush1.bf16.msra.mxu0 0
  %61 = vmatprep.subr.bf16.mxu0 0
  %62 = vmatpush1.bf16.msra.mxu0 0
  %63 = vmatprep.subr.bf16.mxu0 0
  %64 = vmatpush1.bf16.msra.mxu0 0
  %65 = vmatprep.subr.bf16.mxu0 0
  %66 = vmatpush1.bf16.msra.mxu0 0
  %67 = vmatprep.subr.bf16.mxu0 0
  %68 = vmatpush1.bf16.msra.mxu0 %v47
  %69 = vmatprep.subr.bf16.mxu0 0
  %70 = vmatpush2.bf16.msra.mxu0 0
  %71 = vmatprep.subr.bf16.mxu0 0
  %72 = vmatpush2.bf16.msra.mxu0 0
  %73 = vmatprep.subr.bf16.mxu0 0
  %74 = vmatpush2.bf16.msra.mxu0 0
  %75 = vmatprep.subr.bf16.mxu0 0
  %76 = vmatpush2.bf16.msra.mxu0 0
  %77 = vmatprep.subr.bf16.mxu0 0
  %78 = vmatpush2.bf16.msra.mxu0 0
  %79 = vmatprep.subr.bf16.mxu0 0
  %80 = vmatpush2.bf16.msra.mxu0 0
  %81 = vmatprep.subr.bf16.mxu0 0
  %82 = vmatpush2.bf16.msra.mxu0 0
  %83 = vmatprep.subr.bf16.mxu0 0
  %84 = vmatpush2.bf16.msra.mxu0 0
  %85 = vmatprep.mubr.bf16.mxu0 0
  %86 = vmatmul.mubr.bf16.gmra.mxu0 %v51
  %v87 = vpop.f32.mrf.mxu0
  %v88 = vadd.f32 %v36, %v87
  %v89 = vpop.f32.mrf.mxu0
  %v90 = vpop.f32.mrf.mxu0
  %v91 = vadd.f32 %v36, %v90
  %v92 = vpop.f32.mrf.mxu0
  %93 = vdwg.mxu0
  %v94 = vmax.f32 %v88, 0.0
  %v95 = vmax.f32 %v91, 0.0
  %v96 = vpack.c.bf16 %v95, %v94
  %v97 = vld [vmem:[%s3] sm:$0xf]
  %v98 = vld [vmem:[%s3 + $0x4] sm:$0xf]
  %v99 = vld [vmem:[%s3 + $0x8] sm:$0xf]
  %v100 = vld [vmem:[%s3 + $0xc] sm:$0xf]
  %v101 = vld [vmem:[%s3 + $0x10] sm:$0xf]
  %v102 = vld [vmem:[%s3 + $0x14] sm:$0xf]
  %v103 = vld [vmem:[%s3 + $0x18] sm:$0xf]
  %v104 = vld [vmem:[%s3 + $0x1c] sm:$0xf]
  %v105 = vld [vmem:[%s3 + $0x20] sm:$0xf]
  %v106 = vld [vmem:[%s3 + $0x24] sm:$0xf]
  %v107 = vld [vmem:[%s3 + $0x28] sm:$0xf]
  %v108 = vld [vmem:[%s3 + $0x2c] sm:$0xf]
  %v109 = vld [vmem:[%s3 + $0x30] sm:$0xf]
  %v110 = vld [vmem:[%s3 + $0x34] sm:$0xf]
  %v111 = vld [vmem:[%s3 + $0x38] sm:$0xf]
  %v112 = vld [vmem:[%s3 + $0x3c] sm:$0xf]
  %v113 = vld [vmem:[%s4] sm:$0x1]
  %v115 = vlaneseq
  %v116 = vshrl.u32 %v115, 7
  %v117 = vsub.s32 0, %v116
  %v118 = vrot.slane %v113, %v117
  %v136 = vunpack.c.l.b16 %v97
  %v137 = vunpack.c.l.b16 %v98
  %v138 = vunpack.c.l.b16 %v99
  %v139 = vunpack.c.l.b16 %v100
  %v140 = vunpack.c.l.b16 %v101
  %v141 = vunpack.c.l.b16 %v102
  %v142 = vunpack.c.l.b16 %v103
  %v143 = vunpack.c.l.b16 %v104
  %v144 = vunpack.c.l.b16 %v105
  %v145 = vunpack.c.l.b16 %v106
  %v146 = vunpack.c.l.b16 %v107
  %v147 = vunpack.c.l.b16 %v108
  %v148 = vunpack.c.l.b16 %v109
  %v149 = vunpack.c.l.b16 %v110
  %v150 = vunpack.c.l.b16 %v111
  %v151 = vunpack.c.l.b16 %v112
  %v152 = vpack.c.b16 %v137, %v136
  %v153 = vpack.c.b16 %v139, %v138
  %v154 = vpack.c.b16 %v141, %v140
  %v155 = vpack.c.b16 %v143, %v142
  %v156 = vpack.c.b16 %v145, %v144
  %v157 = vpack.c.b16 %v147, %v146
  %v158 = vpack.c.b16 %v149, %v148
  %v159 = vpack.c.b16 %v151, %v150
  %168 = vmatprep.subr.bf16.mxu0 0
  %169 = vmatpush1.bf16.msra.mxu0 %v159
  %170 = vmatprep.subr.bf16.mxu0 0
  %171 = vmatpush1.bf16.msra.mxu0 %v158
  %172 = vmatprep.subr.bf16.mxu0 0
  %173 = vmatpush1.bf16.msra.mxu0 %v157
  %174 = vmatprep.subr.bf16.mxu0 0
  %175 = vmatpush1.bf16.msra.mxu0 %v156
  %176 = vmatprep.subr.bf16.mxu0 0
  %177 = vmatpush1.bf16.msra.mxu0 %v155
  %178 = vmatprep.subr.bf16.mxu0 0
  %179 = vmatpush1.bf16.msra.mxu0 %v154
  %180 = vmatprep.subr.bf16.mxu0 0
  %181 = vmatpush1.bf16.msra.mxu0 %v153
  %182 = vmatprep.subr.bf16.mxu0 0
  %183 = vmatpush1.bf16.msra.mxu0 %v152
  %184 = vmatprep.subr.bf16.mxu0 0
  %185 = vmatpush2.bf16.msra.mxu0 0
  %186 = vmatprep.subr.bf16.mxu0 0
  %187 = vmatpush2.bf16.msra.mxu0 0
  %188 = vmatprep.subr.bf16.mxu0 0
  %189 = vmatpush2.bf16.msra.mxu0 0
  %190 = vmatprep.subr.bf16.mxu0 0
  %191 = vmatpush2.bf16.msra.mxu0 0
  %192 = vmatprep.subr.bf16.mxu0 0
  %193 = vmatpush2.bf16.msra.mxu0 0
  %194 = vmatprep.subr.bf16.mxu0 0
  %195 = vmatpush2.bf16.msra.mxu0 0
  %196 = vmatprep.subr.bf16.mxu0 0
  %197 = vmatpush2.bf16.msra.mxu0 0
  %198 = vmatprep.subr.bf16.mxu0 0
  %199 = vmatpush2.bf16.msra.mxu0 0
  %200 = vmatprep.mubr.bf16.mxu0 0
  %201 = vmatmul.mubr.bf16.gmra.mxu0 %v96
  %v202 = vpop.f32.mrf.mxu0
  %v203 = vadd.f32 %v118, %v202
  %v204 = vpop.f32.mrf.mxu0
  %v205 = vpop.f32.mrf.mxu0
  %v206 = vadd.f32 %v118, %v205
  %v207 = vpop.f32.mrf.mxu0
  %208 = vdwg.mxu0
  %v209 = vmax.f32 %v203, 0.0
  %v210 = vmax.f32 %v206, 0.0
  %v211 = vpack.c.bf16 %v210, %v209
  %v212 = vld [vmem:[%s5] sm:$0xf]
  %v213 = vld [vmem:[%s5 + $0x4] sm:$0xf]
  %v214 = vld [vmem:[%s5 + $0x8] sm:$0xf]
  %v215 = vld [vmem:[%s5 + $0xc] sm:$0xf]
  %v216 = vld [vmem:[%s5 + $0x10] sm:$0xf]
  %v217 = vld [vmem:[%s5 + $0x14] sm:$0xf]
  %v218 = vld [vmem:[%s5 + $0x18] sm:$0xf]
  %v219 = vld [vmem:[%s5 + $0x1c] sm:$0xf]
  %v220 = vld [vmem:[%s6] sm:$0x1]
  %v222 = vlaneseq
  %v223 = vshrl.u32 %v222, 7
  %v224 = vsub.s32 0, %v223
  %v225 = vrot.slane %v220, %v224
  %v235 = vunpack.c.l.b16 %v212
  %v236 = vunpack.c.l.b16 %v213
  %v237 = vunpack.c.l.b16 %v214
  %v238 = vunpack.c.l.b16 %v215
  %v239 = vunpack.c.l.b16 %v216
  %v240 = vunpack.c.l.b16 %v217
  %v241 = vunpack.c.l.b16 %v218
  %v242 = vunpack.c.l.b16 %v219
  %v243 = vpack.c.b16 %v236, %v235
  %v244 = vpack.c.b16 %v238, %v237
  %v245 = vpack.c.b16 %v240, %v239
  %v246 = vpack.c.b16 %v242, %v241
  %vm251 = vcmask 523264
  %v253 = vsel %vm251, %v211, 0
  %255 = vmatprep.subr.bf16.mxu0 0
  %256 = vmatpush1.bf16.msra.mxu0 0
  %257 = vmatprep.subr.bf16.mxu0 0
  %258 = vmatpush1.bf16.msra.mxu0 0
  %259 = vmatprep.subr.bf16.mxu0 0
  %260 = vmatpush1.bf16.msra.mxu0 0
  %261 = vmatprep.subr.bf16.mxu0 0
  %262 = vmatpush1.bf16.msra.mxu0 0
  %263 = vmatprep.subr.bf16.mxu0 0
  %264 = vmatpush1.bf16.msra.mxu0 %v246
  %265 = vmatprep.subr.bf16.mxu0 0
  %266 = vmatpush1.bf16.msra.mxu0 %v245
  %267 = vmatprep.subr.bf16.mxu0 0
  %268 = vmatpush1.bf16.msra.mxu0 %v244
  %269 = vmatprep.subr.bf16.mxu0 0
  %270 = vmatpush1.bf16.msra.mxu0 %v243
  %271 = vmatprep.subr.bf16.mxu0 0
  %272 = vmatpush2.bf16.msra.mxu0 0
  %273 = vmatprep.subr.bf16.mxu0 0
  %274 = vmatpush2.bf16.msra.mxu0 0
  %275 = vmatprep.subr.bf16.mxu0 0
  %276 = vmatpush2.bf16.msra.mxu0 0
  %277 = vmatprep.subr.bf16.mxu0 0
  %278 = vmatpush2.bf16.msra.mxu0 0
  %279 = vmatprep.subr.bf16.mxu0 0
  %280 = vmatpush2.bf16.msra.mxu0 0
  %281 = vmatprep.subr.bf16.mxu0 0
  %282 = vmatpush2.bf16.msra.mxu0 0
  %283 = vmatprep.subr.bf16.mxu0 0
  %284 = vmatpush2.bf16.msra.mxu0 0
  %285 = vmatprep.subr.bf16.mxu0 0
  %286 = vmatpush2.bf16.msra.mxu0 0
  %287 = vmatprep.mubr.bf16.mxu0 0
  %288 = vmatmul.mubr.bf16.gmra.mxu0 %v253
  %v289 = vpop.f32.mrf.mxu0
  %v290 = vadd.f32 %v225, %v289
  %v291 = vpop.f32.mrf.mxu0
  %v292 = vpop.f32.mrf.mxu0
  %v293 = vadd.f32 %v225, %v292
  %v294 = vpop.f32.mrf.mxu0
  %295 = vdwg.mxu0
  %vm296 = vcmask 31744
  %297 = vst.msk [vmem:[%s7] sm:$0xff] %vm296, %v290
  %298 = vst.msk [vmem:[%s7 + $0x8] sm:$0xff] %vm296, %v293
  // Predicated region
  $region30: #{tpu_custom_call.1} parent=0 // pred_check
    _
  $region31: #{tpu_custom_call.1} parent=0 // pred_check_branch
    %300 = sbr.rel (0) target = $region33
  $region32: #{tpu_custom_call.1} parent=0 // pred_region
    _
  $region33: #{tpu_custom_call.1} parent=0 // pred_fallthru
    _
  // Predicated region
  $region34: #{tpu_custom_call.1} parent=0 // pred_check
    _
  $region35: #{tpu_custom_call.1} parent=0 // pred_check_branch
    %302 = sbr.rel (0) target = $region37
  $region36: #{tpu_custom_call.1} parent=0 // pred_region
    _
  $region37: #{tpu_custom_call.1} parent=0 // pred_fallthru
    _

</llo_original>
